<compile_context>
chip_gen: v6e
topology: v6e:2x2x1
jax: 0.10.0
libtpu: 0.0.40
codegen_flags: <defaults>
</compile_context>

<pallas_src>
from functools import partial

import jax
import jax.numpy as jnp
from jax.experimental import pallas as pl
from jax.experimental.pallas import tpu as pltpu


def _round_up(x, m):
    return (x + m - 1) // m * m


def _cdiv(a, b):
    return -(-a // b)


def _vmem_cap_bytes():
    """Physical per-core VMEM capacity, with a conservative fallback."""
    try:
        info = pltpu.get_tpu_info()
        for attr in ("vmem_capacity_bytes", "vmem_size_bytes", "vmem_bytes"):
            v = getattr(info, attr, None)
            if v:
                return int(v)
    except Exception:
        pass
    return 64 << 20  # v7x per-TensorCore VMEM (smallest of the three generations)


# --------------------------------------------------------------------------- #
# Kernel
# --------------------------------------------------------------------------- #
def gru_cell_kernel(x_ref, h_ref, wx_ref, wh_ref, b_ref, o_ref, *,
                    gate_axis, num_gate_tiles, tn):
    """One (batch-tile, gate-width-tile) step of the GRU cell.

    x_ref  : [TB, Dp]     bf16  input batch tile
    h_ref  : [TB, HP]     bf16  hidden batch tile (full width: contraction + blend)
    wx_ref : [Dp, 3*TN]   bf16  x2h weights, gate-tile-major packing
    wh_ref : [HP, 3*TN]   bf16  h2h weights, gate-tile-major packing
    b_ref  : [1, 3*TN]    f32   pre-summed bias (bx + bh), same packing
    o_ref  : [TB, TN]           lane-dense output tile
    """
    # Two accumulated MXU matmuls with f32 accumulation.
    g = jnp.dot(x_ref[...], wx_ref[...], preferred_element_type=jnp.float32)
    g = g + jnp.dot(h_ref[...], wh_ref[...], preferred_element_type=jnp.float32)
    g = g + b_ref[...]

    # Lane-aligned gate slabs (tn is a multiple of 128).
    reset_gate = jax.nn.sigmoid(g[:, 0:tn])
    update_gate = jax.nn.sigmoid(g[:, tn:2 * tn])
    # NOTE: reference uses (reset_gate + h_new), not the usual reset_gate * h_new.
    new_gate = jnp.tanh(g[:, 2 * tn:3 * tn] + reset_gate)

    # Hidden columns of this gate tile, reused from the matmul operand
    # (no second hidden stream from HBM).
    if num_gate_tiles == 1:
        hidden = h_ref[...]
    else:
        col = pl.multiple_of(pl.program_id(gate_axis) * tn, 128)
        hidden = h_ref[:, pl.ds(col, tn)]
    hidden = hidden.astype(jnp.float32)

    # u*h + (1-u)*n  ==  n + u*(h - n): one fewer full-width VPU pass.
    o_ref[...] = (new_gate + update_gate * (hidden - new_gate)).astype(o_ref.dtype)


# --------------------------------------------------------------------------- #
# Wrapper helpers
# --------------------------------------------------------------------------- #
def _plan_tiles(B, Dp, H, out_bpe, act_bpe, cap):
    """Choose batch tile TB, gate-width tile TN and the padded sizes."""
    budget = int(0.45 * cap)            # headroom for pipelining / compiler scratch
    Hq = _round_up(H, 128)

    B8 = _round_up(B, 8)
    nb = _cdiv(B8, 256)
    TB = _round_up(_cdiv(B8, nb), 8)    # near-even batch tiles (<= 256 rows)

    tn_cap = min(Hq, 512)

    def gate_split(cap_tn):
        nj = _cdiv(Hq, cap_tn)
        tn = _round_up(_cdiv(Hq, nj), 128)
        return nj, tn, nj * tn

    nj, TN, HP = gate_split(tn_cap)

    def vmem_need(tb, tn, hp):
        return (2 * tb * Dp * act_bpe            # x tile (double-buffered)
                + 2 * tb * hp * act_bpe          # hidden tile
                + 2 * Dp * 3 * tn * act_bpe      # x2h weight tile
                + 2 * hp * 3 * tn * act_bpe      # h2h weight tile
                + 2 * 3 * tn * 4                 # bias tile
                + 2 * tb * tn * out_bpe          # output tile
                + 6 * tb * 3 * tn * 4)           # f32 intermediates headroom

    while vmem_need(TB, TN, HP) > budget:
        if TN > 128:
            tn_cap = max(128, tn_cap // 2)
            nj, TN, HP = gate_split(tn_cap)
        elif TB > 16:
            TB = max(16, _round_up(TB // 2, 8))
            nb = _cdiv(B8, TB)
        else:
            break

    Bp = TB * nb
    return TB, nb, Bp, TN, nj, HP, vmem_need(TB, TN, HP)


def _pack_weight(w, k_in, kp, h, hp, nj, tn, dtype):
    """[3H, K] Linear weight -> [Kp, 3*HP], gate-tile-major, zero padded."""
    wt = w.T.astype(jnp.float32).reshape(k_in, 3, h)
    wp = jnp.zeros((kp, 3, hp), jnp.float32).at[:k_in, :, :h].set(wt)
    wp = wp.reshape(kp, 3, nj, tn).transpose(0, 2, 1, 3).reshape(kp, 3 * hp)
    return wp.astype(dtype)


def _pack_bias(bx, bh, h, hp, nj, tn):
    b = (bx.astype(jnp.float32) + bh.astype(jnp.float32)).reshape(3, h)
    bp = jnp.zeros((3, hp), jnp.float32).at[:, :h].set(b)
    return bp.reshape(3, nj, tn).transpose(1, 0, 2).reshape(1, 3 * hp)


def _pad_cast(a, rows, cols, dtype):
    r, c = a.shape
    a = a.astype(dtype)
    if (r, c) == (rows, cols):
        return a
    return jnp.zeros((rows, cols), dtype).at[:r, :c].set(a)


# --------------------------------------------------------------------------- #
# Public entry point
# --------------------------------------------------------------------------- #
def gru_cell(x, hidden, wx, bx, wh, bh, *,
             compute_dtype=jnp.bfloat16, out_dtype=None):
    """x: [B, D], hidden: [B, H], wx: [3H, D], bx: [3H], wh: [3H, H], bh: [3H]."""
    B, D = x.shape
    H = hidden.shape[1]
    assert wx.shape == (3 * H, D) and wh.shape == (3 * H, H)
    assert bx.shape == (3 * H,) and bh.shape == (3 * H,)
    out_dtype = x.dtype if out_dtype is None else out_dtype

    act_bpe = jnp.dtype(compute_dtype).itemsize
    out_bpe = jnp.dtype(out_dtype).itemsize
    Dp = _round_up(D, 128)

    cap = _vmem_cap_bytes()
    TB, nb, Bp, TN, nj, HP, need = _plan_tiles(B, Dp, H, out_bpe, act_bpe, cap)

    # ---- parameter packing (plain-JAX glue; hoist/cache it in a real model) ---
    wx_p = _pack_weight(wx, D, Dp, H, HP, nj, TN, compute_dtype)   # [Dp, 3*HP]
    wh_p = _pack_weight(wh, H, HP, H, HP, nj, TN, compute_dtype)   # [HP, 3*HP]
    b_p = _pack_bias(bx, bh, H, HP, nj, TN)                        # [1, 3*HP] f32

    # ---- activation padding / casting (no concat, no f32 hidden stream) -------
    x_p = _pad_cast(x, Bp, Dp, compute_dtype)
    h_p = _pad_cast(hidden, Bp, HP, compute_dtype)

    # ---- grid ordering: keep the larger operand resident across inner axis ----
    w_bytes = (Dp + HP) * 3 * HP * act_bpe        # one full weight sweep
    a_bytes = Bp * (Dp + HP) * act_bpe            # one full activation sweep
    batch_innermost = (nb - 1) * w_bytes > (nj - 1) * a_bytes
    if batch_innermost:
        grid = (nj, nb)
        gate_axis = 0
        act_map = lambda j, i: (i, 0)
        w_map = lambda j, i: (0, j)
        out_map = lambda j, i: (i, j)
    else:
        grid = (nb, nj)
        gate_axis = 1
        act_map = lambda i, j: (i, 0)
        w_map = lambda i, j: (0, j)
        out_map = lambda i, j: (i, j)

    # Capacity-aware VMEM limit (need already counts 2x-buffered blocks).
    vmem_limit = int(min(int(0.85 * cap), max(32 << 20, int(1.5 * need))))

    kernel_fn = partial(gru_cell_kernel, gate_axis=gate_axis,
                        num_gate_tiles=nj, tn=TN)

    def build(single_buffer_resident):
        w_kwargs = {}
        if single_buffer_resident:
            # Weights/bias never change across the grid (nj == 1): one buffer.
            w_kwargs = dict(pipeline_mode=pl.Buffered(1))
        in_specs = [
            pl.BlockSpec((TB, Dp), act_map),
            pl.BlockSpec((TB, HP), act_map),
            pl.BlockSpec((Dp, 3 * TN), w_map, **w_kwargs),
            pl.BlockSpec((HP, 3 * TN), w_map, **w_kwargs),
            pl.BlockSpec((1, 3 * TN), w_map, **w_kwargs),
        ]
        return pl.pallas_call(
            kernel_fn,
            out_shape=jax.ShapeDtypeStruct((Bp, HP), out_dtype),
            grid=grid,
            in_specs=in_specs,
            out_specs=pl.BlockSpec((TB, TN), out_map),
            compiler_params=pltpu.CompilerParams(
                dimension_semantics=("parallel", "parallel"),
                vmem_limit_bytes=vmem_limit),
        )

    args = (x_p, h_p, wx_p, wh_p, b_p)
    if nj == 1:
        try:
            out = build(True)(*args)
        except Exception:   # backend without Buffered(1): fall back, still correct
            out = build(False)(*args)
    else:
        out = build(False)(*args)

    return out[:B, :H]


# --------------------------------------------------------------------------- #
# Pure-JAX reference
# --------------------------------------------------------------------------- #
def gru_cell_ref(x, hidden, wx, bx, wh, bh, cast_dtype=None):
    """Pure-JAX reference mirroring the (fixed) PyTorch forward.

    If cast_dtype is given, the matmul operands AND the hidden state used in the
    final blend are rounded through that dtype (matching the kernel's bf16 MXU
    inputs / bf16 hidden carry with f32 gate math).
    """
    H = hidden.shape[1]
    if cast_dtype is not None:
        xc = x.astype(cast_dtype).astype(jnp.float32)
        hc = hidden.astype(cast_dtype).astype(jnp.float32)
        wxc = wx.astype(cast_dtype).astype(jnp.float32)
        whc = wh.astype(cast_dtype).astype(jnp.float32)
        h_blend = hc
    else:
        xc, hc, wxc, whc = x, hidden, wx, wh
        h_blend = hidden
    hi = jax.lax.Precision.HIGHEST
    gx = jnp.dot(xc, wxc.T, precision=hi) + bx
    gh = jnp.dot(hc, whc.T, precision=hi) + bh
    x_reset, x_update, x_new = gx[:, :H], gx[:, H:2 * H], gx[:, 2 * H:]
    h_reset, h_update, h_new = gh[:, :H], gh[:, H:2 * H], gh[:, 2 * H:]
    reset_gate = jax.nn.sigmoid(x_reset + h_reset)
    update_gate = jax.nn.sigmoid(x_update + h_update)
    new_gate = jnp.tanh(x_new + (reset_gate + h_new))
    return update_gate * h_blend + (1.0 - update_gate) * new_gate


if __name__ == "__main__":
    input_dim, hidden_dim = 16, 32
    B = 8

    key = jax.random.PRNGKey(0)
    kx, kh, kwx, kbx, kwh, kbh = jax.random.split(key, 6)

    # Deterministic parameter init (PyTorch Linear-style uniform bounds).
    bound_x = 1.0 / jnp.sqrt(input_dim)
    bound_h = 1.0 / jnp.sqrt(hidden_dim)
    wx = jax.random.uniform(kwx, (3 * hidden_dim, input_dim), jnp.float32,
                            -bound_x, bound_x)
    bx = jax.random.uniform(kbx, (3 * hidden_dim,), jnp.float32,
                            -bound_x, bound_x)
    wh = jax.random.uniform(kwh, (3 * hidden_dim, hidden_dim), jnp.float32,
                            -bound_h, bound_h)
    bh = jax.random.uniform(kbh, (3 * hidden_dim,), jnp.float32,
                            -bound_h, bound_h)

    x = jax.random.normal(kx, (B, input_dim), jnp.float32)
    hidden = jax.random.normal(kh, (B, hidden_dim), jnp.float32)

    out = gru_cell(x, hidden, wx, bx, wh, bh)
    out = jax.block_until_ready(out)

    # Tight check vs a reference using the same bf16-rounded operands.
    ref_bf16 = gru_cell_ref(x, hidden, wx, bx, wh, bh, cast_dtype=jnp.bfloat16)
    # Loose sanity check vs the full-f32 reference (bf16 rounding only).
    ref_f32 = gru_cell_ref(x, hidden, wx, bx, wh, bh)

    assert out.shape == (B, hidden_dim)
    assert jnp.allclose(out, ref_bf16, atol=1e-4, rtol=1e-4), "mismatch vs bf16 ref"
    assert jnp.allclose(out, ref_f32, atol=1e-1), "mismatch vs f32 ref"

    print("KERNEL_OK")
</pallas_src>

<mosaic_0001>
module attributes {stable_mosaic.version = 11 : i64} {
  func.func @gru_cell_kernel(%arg0: i32, %arg1: i32, %arg2: memref<8x128xbf16, #tpu.memory_space<vmem>>, %arg3: memref<8x128xbf16, #tpu.memory_space<vmem>>, %arg4: memref<128x384xbf16, #tpu.memory_space<vmem>>, %arg5: memref<128x384xbf16, #tpu.memory_space<vmem>>, %arg6: memref<1x384xf32, #tpu.memory_space<vmem>>, %arg7: memref<8x128xf32, #tpu.memory_space<vmem>>) attributes {dimension_semantics = [#tpu.dimension_semantics<parallel>, #tpu.dimension_semantics<parallel>], iteration_bounds = array<i64: 1, 1>, scalar_prefetch = 0 : i64, scratch_operands = 0 : i64, tpu.core_type = #tpu.core_type<tc>, window_params = [{transform_indices = @transform_0, window_bounds = array<i64: 8, 128>}, {transform_indices = @transform_1, window_bounds = array<i64: 8, 128>}, {pipeline_mode = #tpu.pipeline_mode<synchronous>, transform_indices = @transform_2, window_bounds = array<i64: 128, 384>}, {pipeline_mode = #tpu.pipeline_mode<synchronous>, transform_indices = @transform_3, window_bounds = array<i64: 128, 384>}, {pipeline_mode = #tpu.pipeline_mode<synchronous>, transform_indices = @transform_4, window_bounds = array<i64: 1, 384>}, {transform_indices = @transform_5, window_bounds = array<i64: 8, 128>}]} {
    %c0 = arith.constant 0 : index
    %c0_0 = arith.constant 0 : index
    %0 = vector.load %arg2[%c0, %c0_0] : memref<8x128xbf16, #tpu.memory_space<vmem>>, vector<8x128xbf16>
    %c0_1 = arith.constant 0 : index
    %c0_2 = arith.constant 0 : index
    %1 = vector.load %arg4[%c0_1, %c0_2] : memref<128x384xbf16, #tpu.memory_space<vmem>>, vector<128x384xbf16>
    %cst = arith.constant dense<0.000000e+00> : vector<8x384xf32>
    %2 = tpu.matmul %0, %1, %cst {dimension_numbers = #tpu.dot_dimension_numbers<[1], [0], [0], [1], [0, 0, 1, 1], [], []>} : vector<8x128xbf16>, vector<128x384xbf16>, vector<8x384xf32> -> vector<8x384xf32>
    %c0_3 = arith.constant 0 : index
    %c0_4 = arith.constant 0 : index
    %3 = vector.load %arg3[%c0_3, %c0_4] : memref<8x128xbf16, #tpu.memory_space<vmem>>, vector<8x128xbf16>
    %c0_5 = arith.constant 0 : index
    %c0_6 = arith.constant 0 : index
    %4 = vector.load %arg5[%c0_5, %c0_6] : memref<128x384xbf16, #tpu.memory_space<vmem>>, vector<128x384xbf16>
    %cst_7 = arith.constant dense<0.000000e+00> : vector<8x384xf32>
    %5 = tpu.matmul %3, %4, %cst_7 {dimension_numbers = #tpu.dot_dimension_numbers<[1], [0], [0], [1], [0, 0, 1, 1], [], []>} : vector<8x128xbf16>, vector<128x384xbf16>, vector<8x384xf32> -> vector<8x384xf32>
    %6 = arith.addf %2, %5 : vector<8x384xf32>
    %c0_8 = arith.constant 0 : index
    %c0_9 = arith.constant 0 : index
    %7 = vector.load %arg6[%c0_8, %c0_9] : memref<1x384xf32, #tpu.memory_space<vmem>>, vector<1x384xf32>
    %8 = vector.broadcast %7 : vector<1x384xf32> to vector<8x384xf32>
    %9 = arith.addf %6, %8 : vector<8x384xf32>
    %10 = vector.extract_strided_slice %9 {offsets = [0, 0], sizes = [8, 128], strides = [1, 1]} : vector<8x384xf32> to vector<8x128xf32>
    %11 = arith.negf %10 : vector<8x128xf32>
    %12 = math.exp %11 : vector<8x128xf32>
    %cst_10 = arith.constant 1.000000e+00 : f32
    %13 = vector.broadcast %cst_10 : f32 to vector<8x128xf32>
    %14 = arith.addf %13, %12 : vector<8x128xf32>
    %15 = arith.divf %13, %14 : vector<8x128xf32>
    %16 = vector.extract_strided_slice %9 {offsets = [0, 128], sizes = [8, 128], strides = [1, 1]} : vector<8x384xf32> to vector<8x128xf32>
    %17 = arith.negf %16 : vector<8x128xf32>
    %18 = math.exp %17 : vector<8x128xf32>
    %cst_11 = arith.constant 1.000000e+00 : f32
    %19 = vector.broadcast %cst_11 : f32 to vector<8x128xf32>
    %20 = arith.addf %19, %18 : vector<8x128xf32>
    %21 = arith.divf %19, %20 : vector<8x128xf32>
    %22 = vector.extract_strided_slice %9 {offsets = [0, 256], sizes = [8, 128], strides = [1, 1]} : vector<8x384xf32> to vector<8x128xf32>
    %23 = arith.addf %22, %15 : vector<8x128xf32>
    %24 = math.tanh %23 : vector<8x128xf32>
    %c0_12 = arith.constant 0 : index
    %c0_13 = arith.constant 0 : index
    %25 = vector.load %arg3[%c0_12, %c0_13] : memref<8x128xbf16, #tpu.memory_space<vmem>>, vector<8x128xbf16>
    %26 = arith.extf %25 : vector<8x128xbf16> to vector<8x128xf32>
    %27 = arith.subf %26, %24 : vector<8x128xf32>
    %28 = arith.mulf %21, %27 : vector<8x128xf32>
    %29 = arith.addf %24, %28 : vector<8x128xf32>
    %c0_14 = arith.constant 0 : index
    %c0_15 = arith.constant 0 : index
    %30 = vector.load %arg7[%c0_14, %c0_15] : memref<8x128xf32, #tpu.memory_space<vmem>>, vector<8x128xf32>
    tpu.vector_store %arg7[%c0_14, %c0_15], %29 {strides = array<i32>} : memref<8x128xf32, #tpu.memory_space<vmem>>, vector<8x128xf32>,
    return
  }
  func.func @transform_0(%arg0: i32, %arg1: i32) -> (i32, i32) {
    %c0_i32 = arith.constant 0 : i32
    %c0_i32_0 = arith.constant 0 : i32
    return %arg0, %c0_i32 : i32, i32
  }
  func.func @transform_1(%arg0: i32, %arg1: i32) -> (i32, i32) {
    %c0_i32 = arith.constant 0 : i32
    %c0_i32_0 = arith.constant 0 : i32
    return %arg0, %c0_i32 : i32, i32
  }
  func.func @transform_2(%arg0: i32, %arg1: i32) -> (i32, i32) {
    %c0_i32 = arith.constant 0 : i32
    %c0_i32_0 = arith.constant 0 : i32
    return %c0_i32, %arg1 : i32, i32
  }
  func.func @transform_3(%arg0: i32, %arg1: i32) -> (i32, i32) {
    %c0_i32 = arith.constant 0 : i32
    %c0_i32_0 = arith.constant 0 : i32
    return %c0_i32, %arg1 : i32, i32
  }
  func.func @transform_4(%arg0: i32, %arg1: i32) -> (i32, i32) {
    %c0_i32 = arith.constant 0 : i32
    %c0_i32_0 = arith.constant 0 : i32
    return %c0_i32, %arg1 : i32, i32
  }
  func.func @transform_5(%arg0: i32, %arg1: i32) -> (i32, i32) {
    %c0_i32 = arith.constant 0 : i32
    return %arg0, %arg1 : i32, i32
  }
}

module attributes {stable_mosaic.version = 11 : i64} {
  func.func @gru_cell_kernel(%arg0: i32, %arg1: i32, %arg2: memref<8x128xbf16, #tpu.memory_space<vmem>>, %arg3: memref<8x128xbf16, #tpu.memory_space<vmem>>, %arg4: memref<128x384xbf16, #tpu.memory_space<vmem>>, %arg5: memref<128x384xbf16, #tpu.memory_space<vmem>>, %arg6: memref<1x384xf32, #tpu.memory_space<vmem>>, %arg7: memref<8x128xf32, #tpu.memory_space<vmem>>) attributes {dimension_semantics = [#tpu.dimension_semantics<parallel>, #tpu.dimension_semantics<parallel>], iteration_bounds = array<i64: 1, 1>, scalar_prefetch = 0 : i64, scratch_operands = 0 : i64, tpu.core_type = #tpu.core_type<tc>, window_params = [{transform_indices = @transform_0, window_bounds = array<i64: 8, 128>}, {transform_indices = @transform_1, window_bounds = array<i64: 8, 128>}, {transform_indices = @transform_2, window_bounds = array<i64: 128, 384>}, {transform_indices = @transform_3, window_bounds = array<i64: 128, 384>}, {transform_indices = @transform_4, window_bounds = array<i64: 1, 384>}, {transform_indices = @transform_5, window_bounds = array<i64: 8, 128>}]} {
    %c0 = arith.constant 0 : index
    %c0_0 = arith.constant 0 : index
    %0 = vector.load %arg2[%c0, %c0_0] : memref<8x128xbf16, #tpu.memory_space<vmem>>, vector<8x128xbf16>
    %c0_1 = arith.constant 0 : index
    %c0_2 = arith.constant 0 : index
    %1 = vector.load %arg4[%c0_1, %c0_2] : memref<128x384xbf16, #tpu.memory_space<vmem>>, vector<128x384xbf16>
    %cst = arith.constant dense<0.000000e+00> : vector<8x384xf32>
    %2 = tpu.matmul %0, %1, %cst {dimension_numbers = #tpu.dot_dimension_numbers<[1], [0], [0], [1], [0, 0, 1, 1], [], []>} : vector<8x128xbf16>, vector<128x384xbf16>, vector<8x384xf32> -> vector<8x384xf32>
    %c0_3 = arith.constant 0 : index
    %c0_4 = arith.constant 0 : index
    %3 = vector.load %arg3[%c0_3, %c0_4] : memref<8x128xbf16, #tpu.memory_space<vmem>>, vector<8x128xbf16>
    %c0_5 = arith.constant 0 : index
    %c0_6 = arith.constant 0 : index
    %4 = vector.load %arg5[%c0_5, %c0_6] : memref<128x384xbf16, #tpu.memory_space<vmem>>, vector<128x384xbf16>
    %cst_7 = arith.constant dense<0.000000e+00> : vector<8x384xf32>
    %5 = tpu.matmul %3, %4, %cst_7 {dimension_numbers = #tpu.dot_dimension_numbers<[1], [0], [0], [1], [0, 0, 1, 1], [], []>} : vector<8x128xbf16>, vector<128x384xbf16>, vector<8x384xf32> -> vector<8x384xf32>
    %6 = arith.addf %2, %5 : vector<8x384xf32>
    %c0_8 = arith.constant 0 : index
    %c0_9 = arith.constant 0 : index
    %7 = vector.load %arg6[%c0_8, %c0_9] : memref<1x384xf32, #tpu.memory_space<vmem>>, vector<1x384xf32>
    %8 = vector.broadcast %7 : vector<1x384xf32> to vector<8x384xf32>
    %9 = arith.addf %6, %8 : vector<8x384xf32>
    %10 = vector.extract_strided_slice %9 {offsets = [0, 0], sizes = [8, 128], strides = [1, 1]} : vector<8x384xf32> to vector<8x128xf32>
    %11 = arith.negf %10 : vector<8x128xf32>
    %12 = math.exp %11 : vector<8x128xf32>
    %cst_10 = arith.constant 1.000000e+00 : f32
    %13 = vector.broadcast %cst_10 : f32 to vector<8x128xf32>
    %14 = arith.addf %13, %12 : vector<8x128xf32>
    %15 = arith.divf %13, %14 : vector<8x128xf32>
    %16 = vector.extract_strided_slice %9 {offsets = [0, 128], sizes = [8, 128], strides = [1, 1]} : vector<8x384xf32> to vector<8x128xf32>
    %17 = arith.negf %16 : vector<8x128xf32>
    %18 = math.exp %17 : vector<8x128xf32>
    %cst_11 = arith.constant 1.000000e+00 : f32
    %19 = vector.broadcast %cst_11 : f32 to vector<8x128xf32>
    %20 = arith.addf %19, %18 : vector<8x128xf32>
    %21 = arith.divf %19, %20 : vector<8x128xf32>
    %22 = vector.extract_strided_slice %9 {offsets = [0, 256], sizes = [8, 128], strides = [1, 1]} : vector<8x384xf32> to vector<8x128xf32>
    %23 = arith.addf %22, %15 : vector<8x128xf32>
    %24 = math.tanh %23 : vector<8x128xf32>
    %c0_12 = arith.constant 0 : index
    %c0_13 = arith.constant 0 : index
    %25 = vector.load %arg3[%c0_12, %c0_13] : memref<8x128xbf16, #tpu.memory_space<vmem>>, vector<8x128xbf16>
    %26 = arith.extf %25 : vector<8x128xbf16> to vector<8x128xf32>
    %27 = arith.subf %26, %24 : vector<8x128xf32>
    %28 = arith.mulf %21, %27 : vector<8x128xf32>
    %29 = arith.addf %24, %28 : vector<8x128xf32>
    %c0_14 = arith.constant 0 : index
    %c0_15 = arith.constant 0 : index
    %30 = vector.load %arg7[%c0_14, %c0_15] : memref<8x128xf32, #tpu.memory_space<vmem>>, vector<8x128xf32>
    tpu.vector_store %arg7[%c0_14, %c0_15], %29 {strides = array<i32>} : memref<8x128xf32, #tpu.memory_space<vmem>>, vector<8x128xf32>,
    return
  }
  func.func @transform_0(%arg0: i32, %arg1: i32) -> (i32, i32) {
    %c0_i32 = arith.constant 0 : i32
    %c0_i32_0 = arith.constant 0 : i32
    return %arg0, %c0_i32 : i32, i32
  }
  func.func @transform_1(%arg0: i32, %arg1: i32) -> (i32, i32) {
    %c0_i32 = arith.constant 0 : i32
    %c0_i32_0 = arith.constant 0 : i32
    return %arg0, %c0_i32 : i32, i32
  }
  func.func @transform_2(%arg0: i32, %arg1: i32) -> (i32, i32) {
    %c0_i32 = arith.constant 0 : i32
    %c0_i32_0 = arith.constant 0 : i32
    return %c0_i32, %arg1 : i32, i32
  }
  func.func @transform_3(%arg0: i32, %arg1: i32) -> (i32, i32) {
    %c0_i32 = arith.constant 0 : i32
    %c0_i32_0 = arith.constant 0 : i32
    return %c0_i32, %arg1 : i32, i32
  }
  func.func @transform_4(%arg0: i32, %arg1: i32) -> (i32, i32) {
    %c0_i32 = arith.constant 0 : i32
    %c0_i32_0 = arith.constant 0 : i32
    return %c0_i32, %arg1 : i32, i32
  }
  func.func @transform_5(%arg0: i32, %arg1: i32) -> (i32, i32) {
    %c0_i32 = arith.constant 0 : i32
    return %arg0, %arg1 : i32, i32
  }
}

</mosaic_0001>

<llo_original>
// kernel: tpu_custom_call.1
$region0: #{tpu_custom_call.1}
  #allocation0 [shape = 'u32[]', space=smem, size = 0x4, offset = 0x4, fixed_abs, tag = 'smem constant byte address 0x4 - core index']
  #allocation1 [shape = 'u32[144,128]{1,0:T(1,128)}', space=vmem, size = 0x12000, scoped, tag = 'internal scratch']
  %s0 = inlined_call_operand.hbm [shape: bf16[8,128], index: 0, kind: input, shape index: {}]
  %s1 = inlined_call_operand.hbm [shape: bf16[8,128], index: 1, kind: input, shape index: {}]
  %s2 = inlined_call_operand.hbm [shape: bf16[128,384], index: 2, kind: input, shape index: {}]
  %s3 = inlined_call_operand.hbm [shape: bf16[128,384], index: 3, kind: input, shape index: {}]
  %s4 = inlined_call_operand.vmem [shape: f32[1,384], index: 4, kind: input, shape index: {}]
  %s5 = inlined_call_operand.hbm [shape: f32[8,128], index: 5, kind: output, shape index: {}]
  %s6 = sld [smem:[#allocation0]]
  $region46: #{tpu_custom_call.1} parent=0
    _
  %s8 = ssub.s32 1, %s6
  %s9 = scalar_select 0, %s8, %s6
  $region1: #{tpu_custom_call.1} parent=0
    #allocation2 [shape = 'u8[2048]{0}', space=vmem, size = 0x800, scoped, tag = 'input window, operand 0, single buffered']
    #allocation3 [shape = 's32[1]{0}', space=sflag, size = 0x4, scoped, tag = 'scoped memory for tpu_custom_call.1']
    #allocation4 [shape = 's32[1]{0}', space=sflag, size = 0x4, scoped, tag = 'scoped memory for tpu_custom_call.1']
    #allocation5 [shape = 'u8[2048]{0}', space=vmem, size = 0x800, scoped, tag = 'input window, operand 1, single buffered']
    #allocation6 [shape = 's32[1]{0}', space=sflag, size = 0x4, scoped, tag = 'scoped memory for tpu_custom_call.1']
    #allocation7 [shape = 'u8[98304]{0}', space=vmem, size = 0x18000, scoped, tag = 'input window, operand 2, single buffered']
    #allocation8 [shape = 'u8[98304]{0}', space=vmem, size = 0x18000, scoped, tag = 'input window, operand 3, single buffered']
    #allocation9 [shape = 's32[1]{0}', space=sflag, size = 0x4, scoped, tag = 'scoped memory for tpu_custom_call.1']
    #allocation10 [shape = 'u8[4096]{0}', space=vmem, size = 0x1000, scoped, tag = 'output window, operand 0, single buffered']
    %10 = vsyncpa [#allocation3], 0
    %11 = vsyncpa [#allocation6], 0
    %12 = vsyncpa [#allocation9], 0
    %13 = vsyncpa [#allocation4], 0
    // Predicated region
    $region2: #{tpu_custom_call.1} parent=1 // pred_check
      _
    $region3: #{tpu_custom_call.1} parent=1 // pred_check_branch
      %15 = sbr.rel (0) target = $region5
    $region4: #{tpu_custom_call.1} parent=1 // pred_region
      %s17 = ssub.s32 64, 64
      %18 = vsyncadd [#allocation3], %s17
      %s20 = sshll.u32 [#allocation2], 4
      %s21 = int_to_ptr.vmem [resolvable:$true] %s20
      %23 = dma.hbm_to_vmem [thread:$0]  %s0, 64, %s21, [#allocation3]
    $region5: #{tpu_custom_call.1} parent=1 // pred_fallthru
      _
    // Predicated region
    $region6: #{tpu_custom_call.1} parent=1 // pred_check
      _
    $region7: #{tpu_custom_call.1} parent=1 // pred_check_branch
      %25 = sbr.rel (0) target = $region9
    $region8: #{tpu_custom_call.1} parent=1 // pred_region
      %s27 = ssub.s32 64, 64
      %28 = vsyncadd [#allocation6], %s27
      %s30 = sshll.u32 [#allocation5], 4
      %s31 = int_to_ptr.vmem [resolvable:$true] %s30
      %33 = dma.hbm_to_vmem [thread:$0]  %s1, 64, %s31, [#allocation6]
    $region9: #{tpu_custom_call.1} parent=1 // pred_fallthru
      _
    // Predicated region
    $region10: #{tpu_custom_call.1} parent=1 // pred_check
      _
    $region11: #{tpu_custom_call.1} parent=1 // pred_check_branch
      %35 = sbr.rel (0) target = $region13
    $region12: #{tpu_custom_call.1} parent=1 // pred_region
      %s37 = ssub.s32 3072, 3072
      %38 = vsyncadd [#allocation6], %s37
      %s39 = sshll.u32 [#allocation7], 4
      %s40 = int_to_ptr.vmem [resolvable:$true] %s39
      %45 = dma.hbm_to_vmem [thread:$0]  %s2, 3072, %s40, [#allocation6], 192, 192, 12
    $region13: #{tpu_custom_call.1} parent=1 // pred_fallthru
      _
    // Predicated region
    $region14: #{tpu_custom_call.1} parent=1 // pred_check
      _
    $region15: #{tpu_custom_call.1} parent=1 // pred_check_branch
      %47 = sbr.rel (0) target = $region17
    $region16: #{tpu_custom_call.1} parent=1 // pred_region
      %s49 = ssub.s32 3072, 3072
      %50 = vsyncadd [#allocation9], %s49
      %s51 = sshll.u32 [#allocation8], 4
      %s52 = int_to_ptr.vmem [resolvable:$true] %s51
      %57 = dma.hbm_to_vmem [thread:$0]  %s3, 3072, %s52, [#allocation9], 192, 192, 12
    $region17: #{tpu_custom_call.1} parent=1 // pred_fallthru
      _
    // Predicated region
    $region18: #{tpu_custom_call.1} parent=1 // pred_check
      _
    $region19: #{tpu_custom_call.1} parent=1 // pred_check_branch
      %59 = sbr.rel (0) target = $region21
    $region20: #{tpu_custom_call.1} parent=1 // pred_region
      _
    $region21: #{tpu_custom_call.1} parent=1 // pred_fallthru
      _
    // Predicated region
    $region22: #{tpu_custom_call.1} parent=1 // pred_check
      _
    $region23: #{tpu_custom_call.1} parent=1 // pred_check_branch
      %61 = sbr.rel (0) target = $region25
    $region24: #{tpu_custom_call.1} parent=1 // pred_region
      %62 = dma.done [#allocation3], 64
    $region25: #{tpu_custom_call.1} parent=1 // pred_fallthru
      _
    // Predicated region
    $region26: #{tpu_custom_call.1} parent=1 // pred_check
      _
    $region27: #{tpu_custom_call.1} parent=1 // pred_check_branch
      %64 = sbr.rel (0) target = $region29
    $region28: #{tpu_custom_call.1} parent=1 // pred_region
      %65 = dma.done [#allocation6], 64
    $region29: #{tpu_custom_call.1} parent=1 // pred_fallthru
      _
    // Predicated region
    $region30: #{tpu_custom_call.1} parent=1 // pred_check
      _
    $region31: #{tpu_custom_call.1} parent=1 // pred_check_branch
      %67 = sbr.rel (0) target = $region33
    $region32: #{tpu_custom_call.1} parent=1 // pred_region
      %68 = dma.done [#allocation6], 3072
    $region33: #{tpu_custom_call.1} parent=1 // pred_fallthru
      _
    // Predicated region
    $region34: #{tpu_custom_call.1} parent=1 // pred_check
      _
    $region35: #{tpu_custom_call.1} parent=1 // pred_check_branch
      %70 = sbr.rel (0) target = $region37
    $region36: #{tpu_custom_call.1} parent=1 // pred_region
      %71 = dma.done [#allocation9], 3072
    $region37: #{tpu_custom_call.1} parent=1 // pred_fallthru
      _
    %v73 = vld [vmem:[#allocation2] sm:$0xf]
    %v74 = vld [vmem:[#allocation7] sm:$0xff]
    %v75 = vld [vmem:[#allocation7 + $0x8] sm:$0xf]
    %v76 = vld [vmem:[#allocation7 + $0xc] sm:$0xff]
    %v77 = vld [vmem:[#allocation7 + $0x14] sm:$0xf]
    %v78 = vld [vmem:[#allocation7 + $0x18] sm:$0xff]
    %v79 = vld [vmem:[#allocation7 + $0x20] sm:$0xf]
    %v80 = vld [vmem:[#allocation7 + $0x24] sm:$0xff]
    %v81 = vld [vmem:[#allocation7 + $0x2c] sm:$0xf]
    %v82 = vld [vmem:[#allocation7 + $0x30] sm:$0xff]
    %v83 = vld [vmem:[#allocation7 + $0x38] sm:$0xf]
    %v84 = vld [vmem:[#allocation7 + $0x3c] sm:$0xff]
    %v85 = vld [vmem:[#allocation7 + $0x44] sm:$0xf]
    %v86 = vld [vmem:[#allocation7 + $0x48] sm:$0xff]
    %v87 = vld [vmem:[#allocation7 + $0x50] sm:$0xf]
    %v88 = vld [vmem:[#allocation7 + $0x54] sm:$0xff]
    %v89 = vld [vmem:[#allocation7 + $0x5c] sm:$0xf]
    %v90 = vld [vmem:[#allocation7 + $0x60] sm:$0xff]
    %v91 = vld [vmem:[#allocation7 + $0x68] sm:$0xf]
    %v92 = vld [vmem:[#allocation7 + $0x6c] sm:$0xff]
    %v93 = vld [vmem:[#allocation7 + $0x74] sm:$0xf]
    %v94 = vld [vmem:[#allocation7 + $0x78] sm:$0xff]
    %v95 = vld [vmem:[#allocation7 + $0x80] sm:$0xf]
    %v96 = vld [vmem:[#allocation7 + $0x84] sm:$0xff]
    %v97 = vld [vmem:[#allocation7 + $0x8c] sm:$0xf]
    %v98 = vld [vmem:[#allocation7 + $0x90] sm:$0xff]
    %v99 = vld [vmem:[#allocation7 + $0x98] sm:$0xf]
    %v100 = vld [vmem:[#allocation7 + $0x9c] sm:$0xff]
    %v101 = vld [vmem:[#allocation7 + $0xa4] sm:$0xf]
    %v102 = vld [vmem:[#allocation7 + $0xa8] sm:$0xff]
    %v103 = vld [vmem:[#allocation7 + $0xb0] sm:$0xf]
    %v104 = vld [vmem:[#allocation7 + $0xb4] sm:$0xff]
    %v105 = vld [vmem:[#allocation7 + $0xbc] sm:$0xf]
    %v106 = vld [vmem:[#allocation5] sm:$0xf]
    %v107 = vld [vmem:[#allocation8] sm:$0xff]
    %v108 = vld [vmem:[#allocation8 + $0x8] sm:$0xf]
    %v109 = vld [vmem:[#allocation8 + $0xc] sm:$0xff]
    %v110 = vld [vmem:[#allocation8 + $0x14] sm:$0xf]
    %v111 = vld [vmem:[#allocation8 + $0x18] sm:$0xff]
    %v112 = vld [vmem:[#allocation8 + $0x20] sm:$0xf]
    %v113 = vld [vmem:[#allocation8 + $0x24] sm:$0xff]
    %v114 = vld [vmem:[#allocation8 + $0x2c] sm:$0xf]
    %v115 = vld [vmem:[#allocation8 + $0x30] sm:$0xff]
    %v116 = vld [vmem:[#allocation8 + $0x38] sm:$0xf]
    %v117 = vld [vmem:[#allocation8 + $0x3c] sm:$0xff]
    %v118 = vld [vmem:[#allocation8 + $0x44] sm:$0xf]
    %v119 = vld [vmem:[#allocation8 + $0x48] sm:$0xff]
    %v120 = vld [vmem:[#allocation8 + $0x50] sm:$0xf]
    %v121 = vld [vmem:[#allocation8 + $0x54] sm:$0xff]
    %v122 = vld [vmem:[#allocation8 + $0x5c] sm:$0xf]
    %v123 = vld [vmem:[#allocation8 + $0x60] sm:$0xff]
    %v124 = vld [vmem:[#allocation8 + $0x68] sm:$0xf]
    %v125 = vld [vmem:[#allocation8 + $0x6c] sm:$0xff]
    %v126 = vld [vmem:[#allocation8 + $0x74] sm:$0xf]
    %v127 = vld [vmem:[#allocation8 + $0x78] sm:$0xff]
    %v128 = vld [vmem:[#allocation8 + $0x80] sm:$0xf]
    %v129 = vld [vmem:[#allocation8 + $0x84] sm:$0xff]
    %v130 = vld [vmem:[#allocation8 + $0x8c] sm:$0xf]
    %v131 = vld [vmem:[#allocation8 + $0x90] sm:$0xff]
    %v132 = vld [vmem:[#allocation8 + $0x98] sm:$0xf]
    %v133 = vld [vmem:[#allocation8 + $0x9c] sm:$0xff]
    %v134 = vld [vmem:[#allocation8 + $0xa4] sm:$0xf]
    %v135 = vld [vmem:[#allocation8 + $0xa8] sm:$0xff]
    %v136 = vld [vmem:[#allocation8 + $0xb0] sm:$0xf]
    %v137 = vld [vmem:[#allocation8 + $0xb4] sm:$0xff]
    %v138 = vld [vmem:[#allocation8 + $0xbc] sm:$0xf]
    %v171 = vunpack.c.l.b16 %v107
    %v172 = vunpack.c.h.b16 %v107
    %v173 = vunpack.c.l.b16 %v108
    %v174 = vunpack.c.l.b16 %v109
    %v175 = vunpack.c.h.b16 %v109
    %v176 = vunpack.c.l.b16 %v110
    %v177 = vunpack.c.l.b16 %v111
    %v178 = vunpack.c.h.b16 %v111
    %v179 = vunpack.c.l.b16 %v112
    %v180 = vunpack.c.l.b16 %v113
    %v181 = vunpack.c.h.b16 %v113
    %v182 = vunpack.c.l.b16 %v114
    %v183 = vunpack.c.l.b16 %v115
    %v184 = vunpack.c.h.b16 %v115
    %v185 = vunpack.c.l.b16 %v116
    %v186 = vunpack.c.l.b16 %v117
    %v187 = vunpack.c.h.b16 %v117
    %v188 = vunpack.c.l.b16 %v118
    %v189 = vunpack.c.l.b16 %v119
    %v190 = vunpack.c.h.b16 %v119
    %v191 = vunpack.c.l.b16 %v120
    %v192 = vunpack.c.l.b16 %v121
    %v193 = vunpack.c.h.b16 %v121
    %v194 = vunpack.c.l.b16 %v122
    %v195 = vunpack.c.l.b16 %v123
    %v196 = vunpack.c.h.b16 %v123
    %v197 = vunpack.c.l.b16 %v124
    %v198 = vunpack.c.l.b16 %v125
    %v199 = vunpack.c.h.b16 %v125
    %v200 = vunpack.c.l.b16 %v126
    %v201 = vunpack.c.l.b16 %v127
    %v202 = vunpack.c.h.b16 %v127
    %v203 = vunpack.c.l.b16 %v128
    %v204 = vunpack.c.l.b16 %v129
    %v205 = vunpack.c.h.b16 %v129
    %v206 = vunpack.c.l.b16 %v130
    %v207 = vunpack.c.l.b16 %v131
    %v208 = vunpack.c.h.b16 %v131
    %v209 = vunpack.c.l.b16 %v132
    %v210 = vunpack.c.l.b16 %v133
    %v211 = vunpack.c.h.b16 %v133
    %v212 = vunpack.c.l.b16 %v134
    %v213 = vunpack.c.l.b16 %v135
    %v214 = vunpack.c.h.b16 %v135
    %v215 = vunpack.c.l.b16 %v136
    %v216 = vunpack.c.l.b16 %v137
    %v217 = vunpack.c.h.b16 %v137
    %v218 = vunpack.c.l.b16 %v138
    %v219 = vpack.c.b16 %v174, %v171
    %v220 = vpack.c.b16 %v175, %v172
    %v221 = vpack.c.b16 %v176, %v173
    %v222 = vpack.c.b16 %v180, %v177
    %v223 = vpack.c.b16 %v181, %v178
    %v224 = vpack.c.b16 %v182, %v179
    %v225 = vpack.c.b16 %v186, %v183
    %v226 = vpack.c.b16 %v187, %v184
    %v227 = vpack.c.b16 %v188, %v185
    %v228 = vpack.c.b16 %v192, %v189
    %v229 = vpack.c.b16 %v193, %v190
    %v230 = vpack.c.b16 %v194, %v191
    %v231 = vpack.c.b16 %v198, %v195
    %v232 = vpack.c.b16 %v199, %v196
    %v233 = vpack.c.b16 %v200, %v197
    %v234 = vpack.c.b16 %v204, %v201
    %v235 = vpack.c.b16 %v205, %v202
    %v236 = vpack.c.b16 %v206, %v203
    %v237 = vpack.c.b16 %v210, %v207
    %v238 = vpack.c.b16 %v211, %v208
    %v239 = vpack.c.b16 %v212, %v209
    %v240 = vpack.c.b16 %v216, %v213
    %v241 = vpack.c.b16 %v217, %v214
    %v242 = vpack.c.b16 %v218, %v215
    %267 = vmatprep.subr.bf16.mxu0 %v241
    %268 = vmatpush1.bf16.msra.mxu0 %v240
    %269 = vmatprep.subr.bf16.mxu0 %v238
    %270 = vmatpush1.bf16.msra.mxu0 %v237
    %271 = vmatprep.subr.bf16.mxu0 %v235
    %272 = vmatpush1.bf16.msra.mxu0 %v234
    %273 = vmatprep.subr.bf16.mxu0 %v232
    %274 = vmatpush1.bf16.msra.mxu0 %v231
    %275 = vmatprep.subr.bf16.mxu0 %v229
    %276 = vmatpush1.bf16.msra.mxu0 %v228
    %277 = vmatprep.subr.bf16.mxu0 %v226
    %278 = vmatpush1.bf16.msra.mxu0 %v225
    %279 = vmatprep.subr.bf16.mxu0 %v223
    %280 = vmatpush1.bf16.msra.mxu0 %v222
    %281 = vmatprep.subr.bf16.mxu0 %v220
    %282 = vmatpush1.bf16.msra.mxu0 %v219
    %283 = vmatprep.subr.bf16.mxu0 0
    %284 = vmatpush2.bf16.msra.mxu0 0
    %285 = vmatprep.subr.bf16.mxu0 0
    %286 = vmatpush2.bf16.msra.mxu0 0
    %287 = vmatprep.subr.bf16.mxu0 0
    %288 = vmatpush2.bf16.msra.mxu0 0
    %289 = vmatprep.subr.bf16.mxu0 0
    %290 = vmatpush2.bf16.msra.mxu0 0
    %291 = vmatprep.subr.bf16.mxu0 0
    %292 = vmatpush2.bf16.msra.mxu0 0
    %293 = vmatprep.subr.bf16.mxu0 0
    %294 = vmatpush2.bf16.msra.mxu0 0
    %295 = vmatprep.subr.bf16.mxu0 0
    %296 = vmatpush2.bf16.msra.mxu0 0
    %297 = vmatprep.subr.bf16.mxu0 0
    %298 = vmatpush2.bf16.msra.mxu0 0
    %299 = vmatprep.mubr.bf16.mxu0 0
    %300 = vmatmul.mubr.bf16.gmra.mxu0 %v106
    %v301 = vpop.f32.mrf.mxu0
    %v302 = vadd.f32 0.0, %v301
    %v303 = vpop.f32.mrf.mxu0
    %v304 = vadd.f32 0.0, %v303
    %v305 = vpop.f32.mrf.mxu0
    %v306 = vpop.f32.mrf.mxu0
    %307 = vdwg.mxu0
    %308 = vmatprep.subr.bf16.mxu0 0
    %309 = vmatpush1.bf16.msra.mxu0 %v242
    %310 = vmatprep.subr.bf16.mxu0 0
    %311 = vmatpush1.bf16.msra.mxu0 %v239
    %312 = vmatprep.subr.bf16.mxu0 0
    %313 = vmatpush1.bf16.msra.mxu0 %v236
    %314 = vmatprep.subr.bf16.mxu0 0
    %315 = vmatpush1.bf16.msra.mxu0 %v233
    %316 = vmatprep.subr.bf16.mxu0 0
    %317 = vmatpush1.bf16.msra.mxu0 %v230
    %318 = vmatprep.subr.bf16.mxu0 0
    %319 = vmatpush1.bf16.msra.mxu0 %v227
    %320 = vmatprep.subr.bf16.mxu0 0
    %321 = vmatpush1.bf16.msra.mxu0 %v224
    %322 = vmatprep.subr.bf16.mxu0 0
    %323 = vmatpush1.bf16.msra.mxu0 %v221
    %324 = vmatprep.subr.bf16.mxu0 0
    %325 = vmatpush2.bf16.msra.mxu0 0
    %326 = vmatprep.subr.bf16.mxu0 0
    %327 = vmatpush2.bf16.msra.mxu0 0
    %328 = vmatprep.subr.bf16.mxu0 0
    %329 = vmatpush2.bf16.msra.mxu0 0
    %330 = vmatprep.subr.bf16.mxu0 0
    %331 = vmatpush2.bf16.msra.mxu0 0
    %332 = vmatprep.subr.bf16.mxu0 0
    %333 = vmatpush2.bf16.msra.mxu0 0
    %334 = vmatprep.subr.bf16.mxu0 0
    %335 = vmatpush2.bf16.msra.mxu0 0
    %336 = vmatprep.subr.bf16.mxu0 0
    %337 = vmatpush2.bf16.msra.mxu0 0
    %338 = vmatprep.subr.bf16.mxu0 0
    %339 = vmatpush2.bf16.msra.mxu0 0
    %340 = vmatprep.mubr.bf16.mxu0 0
    %341 = vmatmul.mubr.bf16.gmra.mxu0 %v106
    %v342 = vpop.f32.mrf.mxu0
    %v343 = vadd.f32 0.0, %v342
    %v344 = vpop.f32.mrf.mxu0
    %v345 = vpop.f32.mrf.mxu0
    %v346 = vpop.f32.mrf.mxu0
    %347 = vdwg.mxu0
    %v380 = vunpack.c.l.b16 %v74
    %v381 = vunpack.c.h.b16 %v74
    %v382 = vunpack.c.l.b16 %v75
    %v383 = vunpack.c.l.b16 %v76
    %v384 = vunpack.c.h.b16 %v76
    %v385 = vunpack.c.l.b16 %v77
    %v386 = vunpack.c.l.b16 %v78
    %v387 = vunpack.c.h.b16 %v78
    %v388 = vunpack.c.l.b16 %v79
    %v389 = vunpack.c.l.b16 %v80
    %v390 = vunpack.c.h.b16 %v80
    %v391 = vunpack.c.l.b16 %v81
    %v392 = vunpack.c.l.b16 %v82
    %v393 = vunpack.c.h.b16 %v82
    %v394 = vunpack.c.l.b16 %v83
    %v395 = vunpack.c.l.b16 %v84
    %v396 = vunpack.c.h.b16 %v84
    %v397 = vunpack.c.l.b16 %v85
    %v398 = vunpack.c.l.b16 %v86
    %v399 = vunpack.c.h.b16 %v86
    %v400 = vunpack.c.l.b16 %v87
    %v401 = vunpack.c.l.b16 %v88
    %v402 = vunpack.c.h.b16 %v88
    %v403 = vunpack.c.l.b16 %v89
    %v404 = vunpack.c.l.b16 %v90
    %v405 = vunpack.c.h.b16 %v90
    %v406 = vunpack.c.l.b16 %v91
    %v407 = vunpack.c.l.b16 %v92
    %v408 = vunpack.c.h.b16 %v92
    %v409 = vunpack.c.l.b16 %v93
    %v410 = vunpack.c.l.b16 %v94
    %v411 = vunpack.c.h.b16 %v94
    %v412 = vunpack.c.l.b16 %v95
    %v413 = vunpack.c.l.b16 %v96
    %v414 = vunpack.c.h.b16 %v96
    %v415 = vunpack.c.l.b16 %v97
    %v416 = vunpack.c.l.b16 %v98
    %v417 = vunpack.c.h.b16 %v98
    %v418 = vunpack.c.l.b16 %v99
    %v419 = vunpack.c.l.b16 %v100
    %v420 = vunpack.c.h.b16 %v100
    %v421 = vunpack.c.l.b16 %v101
    %v422 = vunpack.c.l.b16 %v102
    %v423 = vunpack.c.h.b16 %v102
    %v424 = vunpack.c.l.b16 %v103
    %v425 = vunpack.c.l.b16 %v104
    %v426 = vunpack.c.h.b16 %v104
    %v427 = vunpack.c.l.b16 %v105
    %v428 = vpack.c.b16 %v383, %v380
    %v429 = vpack.c.b16 %v384, %v381
    %v430 = vpack.c.b16 %v385, %v382
    %v431 = vpack.c.b16 %v389, %v386
    %v432 = vpack.c.b16 %v390, %v387
    %v433 = vpack.c.b16 %v391, %v388
    %v434 = vpack.c.b16 %v395, %v392
    %v435 = vpack.c.b16 %v396, %v393
    %v436 = vpack.c.b16 %v397, %v394
    %v437 = vpack.c.b16 %v401, %v398
    %v438 = vpack.c.b16 %v402, %v399
    %v439 = vpack.c.b16 %v403, %v400
    %v440 = vpack.c.b16 %v407, %v404
    %v441 = vpack.c.b16 %v408, %v405
    %v442 = vpack.c.b16 %v409, %v406
    %v443 = vpack.c.b16 %v413, %v410
    %v444 = vpack.c.b16 %v414, %v411
    %v445 = vpack.c.b16 %v415, %v412
    %v446 = vpack.c.b16 %v419, %v416
    %v447 = vpack.c.b16 %v420, %v417
    %v448 = vpack.c.b16 %v421, %v418
    %v449 = vpack.c.b16 %v425, %v422
    %v450 = vpack.c.b16 %v426, %v423
    %v451 = vpack.c.b16 %v427, %v424
    %476 = vmatprep.subr.bf16.mxu0 %v450
    %477 = vmatpush1.bf16.msra.mxu0 %v449
    %478 = vmatprep.subr.bf16.mxu0 %v447
    %479 = vmatpush1.bf16.msra.mxu0 %v446
    %480 = vmatprep.subr.bf16.mxu0 %v444
    %481 = vmatpush1.bf16.msra.mxu0 %v443
    %482 = vmatprep.subr.bf16.mxu0 %v441
    %483 = vmatpush1.bf16.msra.mxu0 %v440
    %484 = vmatprep.subr.bf16.mxu0 %v438
    %485 = vmatpush1.bf16.msra.mxu0 %v437
    %486 = vmatprep.subr.bf16.mxu0 %v435
    %487 = vmatpush1.bf16.msra.mxu0 %v434
    %488 = vmatprep.subr.bf16.mxu0 %v432
    %489 = vmatpush1.bf16.msra.mxu0 %v431
    %490 = vmatprep.subr.bf16.mxu0 %v429
    %491 = vmatpush1.bf16.msra.mxu0 %v428
    %492 = vmatprep.subr.bf16.mxu0 0
    %493 = vmatpush2.bf16.msra.mxu0 0
    %494 = vmatprep.subr.bf16.mxu0 0
    %495 = vmatpush2.bf16.msra.mxu0 0
    %496 = vmatprep.subr.bf16.mxu0 0
    %497 = vmatpush2.bf16.msra.mxu0 0
    %498 = vmatprep.subr.bf16.mxu0 0
    %499 = vmatpush2.bf16.msra.mxu0 0
    %500 = vmatprep.subr.bf16.mxu0 0
    %501 = vmatpush2.bf16.msra.mxu0 0
    %502 = vmatprep.subr.bf16.mxu0 0
    %503 = vmatpush2.bf16.msra.mxu0 0
    %504 = vmatprep.subr.bf16.mxu0 0
    %505 = vmatpush2.bf16.msra.mxu0 0
    %506 = vmatprep.subr.bf16.mxu0 0
    %507 = vmatpush2.bf16.msra.mxu0 0
    %508 = vmatprep.mubr.bf16.mxu0 0
    %509 = vmatmul.mubr.bf16.gmra.mxu0 %v73
    %v510 = vpop.f32.mrf.mxu0
    %v511 = vadd.f32 %v302, %v510
    %v512 = vpop.f32.mrf.mxu0
    %v513 = vadd.f32 %v304, %v512
    %v514 = vpop.f32.mrf.mxu0
    %v515 = vpop.f32.mrf.mxu0
    %516 = vdwg.mxu0
    %517 = vmatprep.subr.bf16.mxu0 0
    %518 = vmatpush1.bf16.msra.mxu0 %v451
    %519 = vmatprep.subr.bf16.mxu0 0
    %520 = vmatpush1.bf16.msra.mxu0 %v448
    %521 = vmatprep.subr.bf16.mxu0 0
    %522 = vmatpush1.bf16.msra.mxu0 %v445
    %523 = vmatprep.subr.bf16.mxu0 0
    %524 = vmatpush1.bf16.msra.mxu0 %v442
    %525 = vmatprep.subr.bf16.mxu0 0
    %526 = vmatpush1.bf16.msra.mxu0 %v439
    %527 = vmatprep.subr.bf16.mxu0 0
    %528 = vmatpush1.bf16.msra.mxu0 %v436
    %529 = vmatprep.subr.bf16.mxu0 0
    %530 = vmatpush1.bf16.msra.mxu0 %v433
    %531 = vmatprep.subr.bf16.mxu0 0
    %532 = vmatpush1.bf16.msra.mxu0 %v430
    %533 = vmatprep.subr.bf16.mxu0 0
    %534 = vmatpush2.bf16.msra.mxu0 0
    %535 = vmatprep.subr.bf16.mxu0 0
    %536 = vmatpush2.bf16.msra.mxu0 0
    %537 = vmatprep.subr.bf16.mxu0 0
    %538 = vmatpush2.bf16.msra.mxu0 0
    %539 = vmatprep.subr.bf16.mxu0 0
    %540 = vmatpush2.bf16.msra.mxu0 0
    %541 = vmatprep.subr.bf16.mxu0 0
    %542 = vmatpush2.bf16.msra.mxu0 0
    %543 = vmatprep.subr.bf16.mxu0 0
    %544 = vmatpush2.bf16.msra.mxu0 0
    %545 = vmatprep.subr.bf16.mxu0 0
    %546 = vmatpush2.bf16.msra.mxu0 0
    %547 = vmatprep.subr.bf16.mxu0 0
    %548 = vmatpush2.bf16.msra.mxu0 0
    %549 = vmatprep.mubr.bf16.mxu0 0
    %550 = vmatmul.mubr.bf16.gmra.mxu0 %v73
    %v551 = vpop.f32.mrf.mxu0
    %v552 = vadd.f32 %v343, %v551
    %v553 = vpop.f32.mrf.mxu0
    %v554 = vpop.f32.mrf.mxu0
    %v555 = vpop.f32.mrf.mxu0
    %556 = vdwg.mxu0
    %v557 = vld [vmem:[%s4] sm:$0x7]
    %v559 = vlaneseq
    %v560 = vshrl.u32 %v559, 7
    %v561 = vsub.s32 0, %v560
    %v562 = vrot.slane %v557, %v561
    %v563 = vlaneseq
    %v564 = vshrl.u32 %v563, 7
    %v565 = vsub.s32 1, %v564
    %v566 = vrot.slane %v557, %v565
    %v567 = vlaneseq
    %v568 = vshrl.u32 %v567, 7
    %v569 = vsub.s32 2, %v568
    %v570 = vrot.slane %v557, %v569
    %v574 = vadd.f32 %v511, %v562
    %v575 = vadd.f32 %v513, %v566
    %v576 = vadd.f32 %v552, %v570
    %v577 = vxor.u32 %v574, 2147483648
    %v578 = vmul.f32 %v577, 1.442695
    %v579 = vpow.pop %v578
    %v580 = vadd.f32 %v579, 1.0
    %v581 = vrcp.pop %v580
    %v582 = vmul.f32 1.0, %v581
    %v583 = vxor.u32 %v575, 2147483648
    %v584 = vmul.f32 %v583, 1.442695
    %v585 = vpow.pop %v584
    %v586 = vadd.f32 %v585, 1.0
    %v587 = vrcp.pop %v586
    %v588 = vmul.f32 1.0, %v587
    %v589 = vadd.f32 %v576, %v582
    %v590 = vtanh.pop %v589
    %v591 = vunpack.c.l.bf16 %v106
    %v592 = vsub.f32 %v591, %v590
    %v593 = vmul.f32 %v588, %v592
    %v594 = vadd.f32 %v590, %v593
    %595 = vst [vmem:[#allocation10] sm:$0xff] %v594
    // Predicated region
    $region38: #{tpu_custom_call.1} parent=1 // pred_check
      _
    $region39: #{tpu_custom_call.1} parent=1 // pred_check_branch
      %597 = sbr.rel (0) target = $region41
    $region40: #{tpu_custom_call.1} parent=1 // pred_region
      %s599 = ssub.s32 128, 128
      %600 = vsyncadd [#allocation4], %s599
      %s602 = sshll.u32 [#allocation10], 4
      %s603 = int_to_ptr.vmem [resolvable:$true] %s602
      %605 = dma.vmem_to_hbm [thread:$0]  %s603, 128, %s5, [#allocation4]
    $region41: #{tpu_custom_call.1} parent=1 // pred_fallthru
      _
    // Predicated region
    $region42: #{tpu_custom_call.1} parent=1 // pred_check
      _
    $region43: #{tpu_custom_call.1} parent=1 // pred_check_branch
      %607 = sbr.rel (0) target = $region45
    $region44: #{tpu_custom_call.1} parent=1 // pred_region
      %608 = dma.done [#allocation4], 128
    $region45: #{tpu_custom_call.1} parent=1 // pred_fallthru
      _
    %609 = vsyncpa [#allocation3], 1
    %610 = vsyncpa [#allocation6], 1
    %611 = vsyncpa [#allocation9], 1
    %612 = vsyncpa [#allocation4], 1

// kernel: tpu_custom_call.1
$region0: #{tpu_custom_call.1}
  #allocation0 [shape = 'u32[]', space=smem, size = 0x4, offset = 0x4, fixed_abs, tag = 'smem constant byte address 0x4 - core index']
  #allocation1 [shape = 'u32[144,128]{1,0:T(1,128)}', space=vmem, size = 0x12000, scoped, tag = 'internal scratch']
  %s0 = inlined_call_operand.hbm [shape: bf16[8,128], index: 0, kind: input, shape index: {}]
  %s1 = inlined_call_operand.hbm [shape: bf16[8,128], index: 1, kind: input, shape index: {}]
  %s2 = inlined_call_operand.hbm [shape: bf16[128,384], index: 2, kind: input, shape index: {}]
  %s3 = inlined_call_operand.hbm [shape: bf16[128,384], index: 3, kind: input, shape index: {}]
  %s4 = inlined_call_operand.vmem [shape: f32[1,384], index: 4, kind: input, shape index: {}]
  %s5 = inlined_call_operand.hbm [shape: f32[8,128], index: 5, kind: output, shape index: {}]
  %s6 = sld [smem:[#allocation0]]
  $region46: #{tpu_custom_call.1} parent=0
    _
  %s8 = ssub.s32 1, %s6
  %s9 = scalar_select 0, %s8, %s6
  $region1: #{tpu_custom_call.1} parent=0
    #allocation2 [shape = 'u8[2048]{0}', space=vmem, size = 0x800, scoped, tag = 'input window, operand 0, single buffered']
    #allocation3 [shape = 's32[1]{0}', space=sflag, size = 0x4, scoped, tag = 'scoped memory for tpu_custom_call.1']
    #allocation4 [shape = 's32[1]{0}', space=sflag, size = 0x4, scoped, tag = 'scoped memory for tpu_custom_call.1']
    #allocation5 [shape = 'u8[2048]{0}', space=vmem, size = 0x800, scoped, tag = 'input window, operand 1, single buffered']
    #allocation6 [shape = 's32[1]{0}', space=sflag, size = 0x4, scoped, tag = 'scoped memory for tpu_custom_call.1']
    #allocation7 [shape = 'u8[98304]{0}', space=vmem, size = 0x18000, scoped, tag = 'input window, operand 2, single buffered']
    #allocation8 [shape = 'u8[98304]{0}', space=vmem, size = 0x18000, scoped, tag = 'input window, operand 3, single buffered']
    #allocation9 [shape = 's32[1]{0}', space=sflag, size = 0x4, scoped, tag = 'scoped memory for tpu_custom_call.1']
    #allocation10 [shape = 'u8[4096]{0}', space=vmem, size = 0x1000, scoped, tag = 'output window, operand 0, single buffered']
    %10 = vsyncpa [#allocation3], 0
    %11 = vsyncpa [#allocation6], 0
    %12 = vsyncpa [#allocation9], 0
    %13 = vsyncpa [#allocation4], 0
    // Predicated region
    $region2: #{tpu_custom_call.1} parent=1 // pred_check
      _
    $region3: #{tpu_custom_call.1} parent=1 // pred_check_branch
      %15 = sbr.rel (0) target = $region5
    $region4: #{tpu_custom_call.1} parent=1 // pred_region
      %s17 = ssub.s32 64, 64
      %18 = vsyncadd [#allocation3], %s17
      %s20 = sshll.u32 [#allocation2], 4
      %s21 = int_to_ptr.vmem [resolvable:$true] %s20
      %23 = dma.hbm_to_vmem [thread:$0]  %s0, 64, %s21, [#allocation3]
    $region5: #{tpu_custom_call.1} parent=1 // pred_fallthru
      _
    // Predicated region
    $region6: #{tpu_custom_call.1} parent=1 // pred_check
      _
    $region7: #{tpu_custom_call.1} parent=1 // pred_check_branch
      %25 = sbr.rel (0) target = $region9
    $region8: #{tpu_custom_call.1} parent=1 // pred_region
      %s27 = ssub.s32 64, 64
      %28 = vsyncadd [#allocation6], %s27
      %s30 = sshll.u32 [#allocation5], 4
      %s31 = int_to_ptr.vmem [resolvable:$true] %s30
      %33 = dma.hbm_to_vmem [thread:$0]  %s1, 64, %s31, [#allocation6]
    $region9: #{tpu_custom_call.1} parent=1 // pred_fallthru
      _
    // Predicated region
    $region10: #{tpu_custom_call.1} parent=1 // pred_check
      _
    $region11: #{tpu_custom_call.1} parent=1 // pred_check_branch
      %35 = sbr.rel (0) target = $region13
    $region12: #{tpu_custom_call.1} parent=1 // pred_region
      %s37 = ssub.s32 3072, 3072
      %38 = vsyncadd [#allocation6], %s37
      %s39 = sshll.u32 [#allocation7], 4
      %s40 = int_to_ptr.vmem [resolvable:$true] %s39
      %45 = dma.hbm_to_vmem [thread:$0]  %s2, 3072, %s40, [#allocation6], 192, 192, 12
    $region13: #{tpu_custom_call.1} parent=1 // pred_fallthru
      _
    // Predicated region
    $region14: #{tpu_custom_call.1} parent=1 // pred_check
      _
    $region15: #{tpu_custom_call.1} parent=1 // pred_check_branch
      %47 = sbr.rel (0) target = $region17
    $region16: #{tpu_custom_call.1} parent=1 // pred_region
      %s49 = ssub.s32 3072, 3072
      %50 = vsyncadd [#allocation9], %s49
      %s51 = sshll.u32 [#allocation8], 4
      %s52 = int_to_ptr.vmem [resolvable:$true] %s51
      %57 = dma.hbm_to_vmem [thread:$0]  %s3, 3072, %s52, [#allocation9], 192, 192, 12
    $region17: #{tpu_custom_call.1} parent=1 // pred_fallthru
      _
    // Predicated region
    $region18: #{tpu_custom_call.1} parent=1 // pred_check
      _
    $region19: #{tpu_custom_call.1} parent=1 // pred_check_branch
      %59 = sbr.rel (0) target = $region21
    $region20: #{tpu_custom_call.1} parent=1 // pred_region
      _
    $region21: #{tpu_custom_call.1} parent=1 // pred_fallthru
      _
    // Predicated region
    $region22: #{tpu_custom_call.1} parent=1 // pred_check
      _
    $region23: #{tpu_custom_call.1} parent=1 // pred_check_branch
      %61 = sbr.rel (0) target = $region25
    $region24: #{tpu_custom_call.1} parent=1 // pred_region
      %62 = dma.done [#allocation3], 64
    $region25: #{tpu_custom_call.1} parent=1 // pred_fallthru
      _
    // Predicated region
    $region26: #{tpu_custom_call.1} parent=1 // pred_check
      _
    $region27: #{tpu_custom_call.1} parent=1 // pred_check_branch
      %64 = sbr.rel (0) target = $region29
    $region28: #{tpu_custom_call.1} parent=1 // pred_region
      %65 = dma.done [#allocation6], 64
    $region29: #{tpu_custom_call.1} parent=1 // pred_fallthru
      _
    // Predicated region
    $region30: #{tpu_custom_call.1} parent=1 // pred_check
      _
    $region31: #{tpu_custom_call.1} parent=1 // pred_check_branch
      %67 = sbr.rel (0) target = $region33
    $region32: #{tpu_custom_call.1} parent=1 // pred_region
      %68 = dma.done [#allocation6], 3072
    $region33: #{tpu_custom_call.1} parent=1 // pred_fallthru
      _
    // Predicated region
    $region34: #{tpu_custom_call.1} parent=1 // pred_check
      _
    $region35: #{tpu_custom_call.1} parent=1 // pred_check_branch
      %70 = sbr.rel (0) target = $region37
    $region36: #{tpu_custom_call.1} parent=1 // pred_region
      %71 = dma.done [#allocation9], 3072
    $region37: #{tpu_custom_call.1} parent=1 // pred_fallthru
      _
    %v73 = vld [vmem:[#allocation2] sm:$0xf]
    %v74 = vld [vmem:[#allocation7] sm:$0xff]
    %v75 = vld [vmem:[#allocation7 + $0x8] sm:$0xf]
    %v76 = vld [vmem:[#allocation7 + $0xc] sm:$0xff]
    %v77 = vld [vmem:[#allocation7 + $0x14] sm:$0xf]
    %v78 = vld [vmem:[#allocation7 + $0x18] sm:$0xff]
    %v79 = vld [vmem:[#allocation7 + $0x20] sm:$0xf]
    %v80 = vld [vmem:[#allocation7 + $0x24] sm:$0xff]
    %v81 = vld [vmem:[#allocation7 + $0x2c] sm:$0xf]
    %v82 = vld [vmem:[#allocation7 + $0x30] sm:$0xff]
    %v83 = vld [vmem:[#allocation7 + $0x38] sm:$0xf]
    %v84 = vld [vmem:[#allocation7 + $0x3c] sm:$0xff]
    %v85 = vld [vmem:[#allocation7 + $0x44] sm:$0xf]
    %v86 = vld [vmem:[#allocation7 + $0x48] sm:$0xff]
    %v87 = vld [vmem:[#allocation7 + $0x50] sm:$0xf]
    %v88 = vld [vmem:[#allocation7 + $0x54] sm:$0xff]
    %v89 = vld [vmem:[#allocation7 + $0x5c] sm:$0xf]
    %v90 = vld [vmem:[#allocation7 + $0x60] sm:$0xff]
    %v91 = vld [vmem:[#allocation7 + $0x68] sm:$0xf]
    %v92 = vld [vmem:[#allocation7 + $0x6c] sm:$0xff]
    %v93 = vld [vmem:[#allocation7 + $0x74] sm:$0xf]
    %v94 = vld [vmem:[#allocation7 + $0x78] sm:$0xff]
    %v95 = vld [vmem:[#allocation7 + $0x80] sm:$0xf]
    %v96 = vld [vmem:[#allocation7 + $0x84] sm:$0xff]
    %v97 = vld [vmem:[#allocation7 + $0x8c] sm:$0xf]
    %v98 = vld [vmem:[#allocation7 + $0x90] sm:$0xff]
    %v99 = vld [vmem:[#allocation7 + $0x98] sm:$0xf]
    %v100 = vld [vmem:[#allocation7 + $0x9c] sm:$0xff]
    %v101 = vld [vmem:[#allocation7 + $0xa4] sm:$0xf]
    %v102 = vld [vmem:[#allocation7 + $0xa8] sm:$0xff]
    %v103 = vld [vmem:[#allocation7 + $0xb0] sm:$0xf]
    %v104 = vld [vmem:[#allocation7 + $0xb4] sm:$0xff]
    %v105 = vld [vmem:[#allocation7 + $0xbc] sm:$0xf]
    %v106 = vld [vmem:[#allocation5] sm:$0xf]
    %v107 = vld [vmem:[#allocation8] sm:$0xff]
    %v108 = vld [vmem:[#allocation8 + $0x8] sm:$0xf]
    %v109 = vld [vmem:[#allocation8 + $0xc] sm:$0xff]
    %v110 = vld [vmem:[#allocation8 + $0x14] sm:$0xf]
    %v111 = vld [vmem:[#allocation8 + $0x18] sm:$0xff]
    %v112 = vld [vmem:[#allocation8 + $0x20] sm:$0xf]
    %v113 = vld [vmem:[#allocation8 + $0x24] sm:$0xff]
    %v114 = vld [vmem:[#allocation8 + $0x2c] sm:$0xf]
    %v115 = vld [vmem:[#allocation8 + $0x30] sm:$0xff]
    %v116 = vld [vmem:[#allocation8 + $0x38] sm:$0xf]
    %v117 = vld [vmem:[#allocation8 + $0x3c] sm:$0xff]
    %v118 = vld [vmem:[#allocation8 + $0x44] sm:$0xf]
    %v119 = vld [vmem:[#allocation8 + $0x48] sm:$0xff]
    %v120 = vld [vmem:[#allocation8 + $0x50] sm:$0xf]
    %v121 = vld [vmem:[#allocation8 + $0x54] sm:$0xff]
    %v122 = vld [vmem:[#allocation8 + $0x5c] sm:$0xf]
    %v123 = vld [vmem:[#allocation8 + $0x60] sm:$0xff]
    %v124 = vld [vmem:[#allocation8 + $0x68] sm:$0xf]
    %v125 = vld [vmem:[#allocation8 + $0x6c] sm:$0xff]
    %v126 = vld [vmem:[#allocation8 + $0x74] sm:$0xf]
    %v127 = vld [vmem:[#allocation8 + $0x78] sm:$0xff]
    %v128 = vld [vmem:[#allocation8 + $0x80] sm:$0xf]
    %v129 = vld [vmem:[#allocation8 + $0x84] sm:$0xff]
    %v130 = vld [vmem:[#allocation8 + $0x8c] sm:$0xf]
    %v131 = vld [vmem:[#allocation8 + $0x90] sm:$0xff]
    %v132 = vld [vmem:[#allocation8 + $0x98] sm:$0xf]
    %v133 = vld [vmem:[#allocation8 + $0x9c] sm:$0xff]
    %v134 = vld [vmem:[#allocation8 + $0xa4] sm:$0xf]
    %v135 = vld [vmem:[#allocation8 + $0xa8] sm:$0xff]
    %v136 = vld [vmem:[#allocation8 + $0xb0] sm:$0xf]
    %v137 = vld [vmem:[#allocation8 + $0xb4] sm:$0xff]
    %v138 = vld [vmem:[#allocation8 + $0xbc] sm:$0xf]
    %v171 = vunpack.c.l.b16 %v107
    %v172 = vunpack.c.h.b16 %v107
    %v173 = vunpack.c.l.b16 %v108
    %v174 = vunpack.c.l.b16 %v109
    %v175 = vunpack.c.h.b16 %v109
    %v176 = vunpack.c.l.b16 %v110
    %v177 = vunpack.c.l.b16 %v111
    %v178 = vunpack.c.h.b16 %v111
    %v179 = vunpack.c.l.b16 %v112
    %v180 = vunpack.c.l.b16 %v113
    %v181 = vunpack.c.h.b16 %v113
    %v182 = vunpack.c.l.b16 %v114
    %v183 = vunpack.c.l.b16 %v115
    %v184 = vunpack.c.h.b16 %v115
    %v185 = vunpack.c.l.b16 %v116
    %v186 = vunpack.c.l.b16 %v117
    %v187 = vunpack.c.h.b16 %v117
    %v188 = vunpack.c.l.b16 %v118
    %v189 = vunpack.c.l.b16 %v119
    %v190 = vunpack.c.h.b16 %v119
    %v191 = vunpack.c.l.b16 %v120
    %v192 = vunpack.c.l.b16 %v121
    %v193 = vunpack.c.h.b16 %v121
    %v194 = vunpack.c.l.b16 %v122
    %v195 = vunpack.c.l.b16 %v123
    %v196 = vunpack.c.h.b16 %v123
    %v197 = vunpack.c.l.b16 %v124
    %v198 = vunpack.c.l.b16 %v125
    %v199 = vunpack.c.h.b16 %v125
    %v200 = vunpack.c.l.b16 %v126
    %v201 = vunpack.c.l.b16 %v127
    %v202 = vunpack.c.h.b16 %v127
    %v203 = vunpack.c.l.b16 %v128
    %v204 = vunpack.c.l.b16 %v129
    %v205 = vunpack.c.h.b16 %v129
    %v206 = vunpack.c.l.b16 %v130
    %v207 = vunpack.c.l.b16 %v131
    %v208 = vunpack.c.h.b16 %v131
    %v209 = vunpack.c.l.b16 %v132
    %v210 = vunpack.c.l.b16 %v133
    %v211 = vunpack.c.h.b16 %v133
    %v212 = vunpack.c.l.b16 %v134
    %v213 = vunpack.c.l.b16 %v135
    %v214 = vunpack.c.h.b16 %v135
    %v215 = vunpack.c.l.b16 %v136
    %v216 = vunpack.c.l.b16 %v137
    %v217 = vunpack.c.h.b16 %v137
    %v218 = vunpack.c.l.b16 %v138
    %v219 = vpack.c.b16 %v174, %v171
    %v220 = vpack.c.b16 %v175, %v172
    %v221 = vpack.c.b16 %v176, %v173
    %v222 = vpack.c.b16 %v180, %v177
    %v223 = vpack.c.b16 %v181, %v178
    %v224 = vpack.c.b16 %v182, %v179
    %v225 = vpack.c.b16 %v186, %v183
    %v226 = vpack.c.b16 %v187, %v184
    %v227 = vpack.c.b16 %v188, %v185
    %v228 = vpack.c.b16 %v192, %v189
    %v229 = vpack.c.b16 %v193, %v190
    %v230 = vpack.c.b16 %v194, %v191
    %v231 = vpack.c.b16 %v198, %v195
    %v232 = vpack.c.b16 %v199, %v196
    %v233 = vpack.c.b16 %v200, %v197
    %v234 = vpack.c.b16 %v204, %v201
    %v235 = vpack.c.b16 %v205, %v202
    %v236 = vpack.c.b16 %v206, %v203
    %v237 = vpack.c.b16 %v210, %v207
    %v238 = vpack.c.b16 %v211, %v208
    %v239 = vpack.c.b16 %v212, %v209
    %v240 = vpack.c.b16 %v216, %v213
    %v241 = vpack.c.b16 %v217, %v214
    %v242 = vpack.c.b16 %v218, %v215
    %267 = vmatprep.subr.bf16.mxu0 %v241
    %268 = vmatpush1.bf16.msra.mxu0 %v240
    %269 = vmatprep.subr.bf16.mxu0 %v238
    %270 = vmatpush1.bf16.msra.mxu0 %v237
    %271 = vmatprep.subr.bf16.mxu0 %v235
    %272 = vmatpush1.bf16.msra.mxu0 %v234
    %273 = vmatprep.subr.bf16.mxu0 %v232
    %274 = vmatpush1.bf16.msra.mxu0 %v231
    %275 = vmatprep.subr.bf16.mxu0 %v229
    %276 = vmatpush1.bf16.msra.mxu0 %v228
    %277 = vmatprep.subr.bf16.mxu0 %v226
    %278 = vmatpush1.bf16.msra.mxu0 %v225
    %279 = vmatprep.subr.bf16.mxu0 %v223
    %280 = vmatpush1.bf16.msra.mxu0 %v222
    %281 = vmatprep.subr.bf16.mxu0 %v220
    %282 = vmatpush1.bf16.msra.mxu0 %v219
    %283 = vmatprep.subr.bf16.mxu0 0
    %284 = vmatpush2.bf16.msra.mxu0 0
    %285 = vmatprep.subr.bf16.mxu0 0
    %286 = vmatpush2.bf16.msra.mxu0 0
    %287 = vmatprep.subr.bf16.mxu0 0
    %288 = vmatpush2.bf16.msra.mxu0 0
    %289 = vmatprep.subr.bf16.mxu0 0
    %290 = vmatpush2.bf16.msra.mxu0 0
    %291 = vmatprep.subr.bf16.mxu0 0
    %292 = vmatpush2.bf16.msra.mxu0 0
    %293 = vmatprep.subr.bf16.mxu0 0
    %294 = vmatpush2.bf16.msra.mxu0 0
    %295 = vmatprep.subr.bf16.mxu0 0
    %296 = vmatpush2.bf16.msra.mxu0 0
    %297 = vmatprep.subr.bf16.mxu0 0
    %298 = vmatpush2.bf16.msra.mxu0 0
    %299 = vmatprep.mubr.bf16.mxu0 0
    %300 = vmatmul.mubr.bf16.gmra.mxu0 %v106
    %v301 = vpop.f32.mrf.mxu0
    %v302 = vadd.f32 0.0, %v301
    %v303 = vpop.f32.mrf.mxu0
    %v304 = vadd.f32 0.0, %v303
    %v305 = vpop.f32.mrf.mxu0
    %v306 = vpop.f32.mrf.mxu0
    %307 = vdwg.mxu0
    %308 = vmatprep.subr.bf16.mxu0 0
    %309 = vmatpush1.bf16.msra.mxu0 %v242
    %310 = vmatprep.subr.bf16.mxu0 0
    %311 = vmatpush1.bf16.msra.mxu0 %v239
    %312 = vmatprep.subr.bf16.mxu0 0
    %313 = vmatpush1.bf16.msra.mxu0 %v236
    %314 = vmatprep.subr.bf16.mxu0 0
    %315 = vmatpush1.bf16.msra.mxu0 %v233
    %316 = vmatprep.subr.bf16.mxu0 0
    %317 = vmatpush1.bf16.msra.mxu0 %v230
    %318 = vmatprep.subr.bf16.mxu0 0
    %319 = vmatpush1.bf16.msra.mxu0 %v227
    %320 = vmatprep.subr.bf16.mxu0 0
    %321 = vmatpush1.bf16.msra.mxu0 %v224
    %322 = vmatprep.subr.bf16.mxu0 0
    %323 = vmatpush1.bf16.msra.mxu0 %v221
    %324 = vmatprep.subr.bf16.mxu0 0
    %325 = vmatpush2.bf16.msra.mxu0 0
    %326 = vmatprep.subr.bf16.mxu0 0
    %327 = vmatpush2.bf16.msra.mxu0 0
    %328 = vmatprep.subr.bf16.mxu0 0
    %329 = vmatpush2.bf16.msra.mxu0 0
    %330 = vmatprep.subr.bf16.mxu0 0
    %331 = vmatpush2.bf16.msra.mxu0 0
    %332 = vmatprep.subr.bf16.mxu0 0
    %333 = vmatpush2.bf16.msra.mxu0 0
    %334 = vmatprep.subr.bf16.mxu0 0
    %335 = vmatpush2.bf16.msra.mxu0 0
    %336 = vmatprep.subr.bf16.mxu0 0
    %337 = vmatpush2.bf16.msra.mxu0 0
    %338 = vmatprep.subr.bf16.mxu0 0
    %339 = vmatpush2.bf16.msra.mxu0 0
    %340 = vmatprep.mubr.bf16.mxu0 0
    %341 = vmatmul.mubr.bf16.gmra.mxu0 %v106
    %v342 = vpop.f32.mrf.mxu0
    %v343 = vadd.f32 0.0, %v342
    %v344 = vpop.f32.mrf.mxu0
    %v345 = vpop.f32.mrf.mxu0
    %v346 = vpop.f32.mrf.mxu0
    %347 = vdwg.mxu0
    %v380 = vunpack.c.l.b16 %v74
    %v381 = vunpack.c.h.b16 %v74
    %v382 = vunpack.c.l.b16 %v75
    %v383 = vunpack.c.l.b16 %v76
    %v384 = vunpack.c.h.b16 %v76
    %v385 = vunpack.c.l.b16 %v77
    %v386 = vunpack.c.l.b16 %v78
    %v387 = vunpack.c.h.b16 %v78
    %v388 = vunpack.c.l.b16 %v79
    %v389 = vunpack.c.l.b16 %v80
    %v390 = vunpack.c.h.b16 %v80
    %v391 = vunpack.c.l.b16 %v81
    %v392 = vunpack.c.l.b16 %v82
    %v393 = vunpack.c.h.b16 %v82
    %v394 = vunpack.c.l.b16 %v83
    %v395 = vunpack.c.l.b16 %v84
    %v396 = vunpack.c.h.b16 %v84
    %v397 = vunpack.c.l.b16 %v85
    %v398 = vunpack.c.l.b16 %v86
    %v399 = vunpack.c.h.b16 %v86
    %v400 = vunpack.c.l.b16 %v87
    %v401 = vunpack.c.l.b16 %v88
    %v402 = vunpack.c.h.b16 %v88
    %v403 = vunpack.c.l.b16 %v89
    %v404 = vunpack.c.l.b16 %v90
    %v405 = vunpack.c.h.b16 %v90
    %v406 = vunpack.c.l.b16 %v91
    %v407 = vunpack.c.l.b16 %v92
    %v408 = vunpack.c.h.b16 %v92
    %v409 = vunpack.c.l.b16 %v93
    %v410 = vunpack.c.l.b16 %v94
    %v411 = vunpack.c.h.b16 %v94
    %v412 = vunpack.c.l.b16 %v95
    %v413 = vunpack.c.l.b16 %v96
    %v414 = vunpack.c.h.b16 %v96
    %v415 = vunpack.c.l.b16 %v97
    %v416 = vunpack.c.l.b16 %v98
    %v417 = vunpack.c.h.b16 %v98
    %v418 = vunpack.c.l.b16 %v99
    %v419 = vunpack.c.l.b16 %v100
    %v420 = vunpack.c.h.b16 %v100
    %v421 = vunpack.c.l.b16 %v101
    %v422 = vunpack.c.l.b16 %v102
    %v423 = vunpack.c.h.b16 %v102
    %v424 = vunpack.c.l.b16 %v103
    %v425 = vunpack.c.l.b16 %v104
    %v426 = vunpack.c.h.b16 %v104
    %v427 = vunpack.c.l.b16 %v105
    %v428 = vpack.c.b16 %v383, %v380
    %v429 = vpack.c.b16 %v384, %v381
    %v430 = vpack.c.b16 %v385, %v382
    %v431 = vpack.c.b16 %v389, %v386
    %v432 = vpack.c.b16 %v390, %v387
    %v433 = vpack.c.b16 %v391, %v388
    %v434 = vpack.c.b16 %v395, %v392
    %v435 = vpack.c.b16 %v396, %v393
    %v436 = vpack.c.b16 %v397, %v394
    %v437 = vpack.c.b16 %v401, %v398
    %v438 = vpack.c.b16 %v402, %v399
    %v439 = vpack.c.b16 %v403, %v400
    %v440 = vpack.c.b16 %v407, %v404
    %v441 = vpack.c.b16 %v408, %v405
    %v442 = vpack.c.b16 %v409, %v406
    %v443 = vpack.c.b16 %v413, %v410
    %v444 = vpack.c.b16 %v414, %v411
    %v445 = vpack.c.b16 %v415, %v412
    %v446 = vpack.c.b16 %v419, %v416
    %v447 = vpack.c.b16 %v420, %v417
    %v448 = vpack.c.b16 %v421, %v418
    %v449 = vpack.c.b16 %v425, %v422
    %v450 = vpack.c.b16 %v426, %v423
    %v451 = vpack.c.b16 %v427, %v424
    %476 = vmatprep.subr.bf16.mxu0 %v450
    %477 = vmatpush1.bf16.msra.mxu0 %v449
    %478 = vmatprep.subr.bf16.mxu0 %v447
    %479 = vmatpush1.bf16.msra.mxu0 %v446
    %480 = vmatprep.subr.bf16.mxu0 %v444
    %481 = vmatpush1.bf16.msra.mxu0 %v443
    %482 = vmatprep.subr.bf16.mxu0 %v441
    %483 = vmatpush1.bf16.msra.mxu0 %v440
    %484 = vmatprep.subr.bf16.mxu0 %v438
    %485 = vmatpush1.bf16.msra.mxu0 %v437
    %486 = vmatprep.subr.bf16.mxu0 %v435
    %487 = vmatpush1.bf16.msra.mxu0 %v434
    %488 = vmatprep.subr.bf16.mxu0 %v432
    %489 = vmatpush1.bf16.msra.mxu0 %v431
    %490 = vmatprep.subr.bf16.mxu0 %v429
    %491 = vmatpush1.bf16.msra.mxu0 %v428
    %492 = vmatprep.subr.bf16.mxu0 0
    %493 = vmatpush2.bf16.msra.mxu0 0
    %494 = vmatprep.subr.bf16.mxu0 0
    %495 = vmatpush2.bf16.msra.mxu0 0
    %496 = vmatprep.subr.bf16.mxu0 0
    %497 = vmatpush2.bf16.msra.mxu0 0
    %498 = vmatprep.subr.bf16.mxu0 0
    %499 = vmatpush2.bf16.msra.mxu0 0
    %500 = vmatprep.subr.bf16.mxu0 0
    %501 = vmatpush2.bf16.msra.mxu0 0
    %502 = vmatprep.subr.bf16.mxu0 0
    %503 = vmatpush2.bf16.msra.mxu0 0
    %504 = vmatprep.subr.bf16.mxu0 0
    %505 = vmatpush2.bf16.msra.mxu0 0
    %506 = vmatprep.subr.bf16.mxu0 0
    %507 = vmatpush2.bf16.msra.mxu0 0
    %508 = vmatprep.mubr.bf16.mxu0 0
    %509 = vmatmul.mubr.bf16.gmra.mxu0 %v73
    %v510 = vpop.f32.mrf.mxu0
    %v511 = vadd.f32 %v302, %v510
    %v512 = vpop.f32.mrf.mxu0
    %v513 = vadd.f32 %v304, %v512
    %v514 = vpop.f32.mrf.mxu0
    %v515 = vpop.f32.mrf.mxu0
    %516 = vdwg.mxu0
    %517 = vmatprep.subr.bf16.mxu0 0
    %518 = vmatpush1.bf16.msra.mxu0 %v451
    %519 = vmatprep.subr.bf16.mxu0 0
    %520 = vmatpush1.bf16.msra.mxu0 %v448
    %521 = vmatprep.subr.bf16.mxu0 0
    %522 = vmatpush1.bf16.msra.mxu0 %v445
    %523 = vmatprep.subr.bf16.mxu0 0
    %524 = vmatpush1.bf16.msra.mxu0 %v442
    %525 = vmatprep.subr.bf16.mxu0 0
    %526 = vmatpush1.bf16.msra.mxu0 %v439
    %527 = vmatprep.subr.bf16.mxu0 0
    %528 = vmatpush1.bf16.msra.mxu0 %v436
    %529 = vmatprep.subr.bf16.mxu0 0
    %530 = vmatpush1.bf16.msra.mxu0 %v433
    %531 = vmatprep.subr.bf16.mxu0 0
    %532 = vmatpush1.bf16.msra.mxu0 %v430
    %533 = vmatprep.subr.bf16.mxu0 0
    %534 = vmatpush2.bf16.msra.mxu0 0
    %535 = vmatprep.subr.bf16.mxu0 0
    %536 = vmatpush2.bf16.msra.mxu0 0
    %537 = vmatprep.subr.bf16.mxu0 0
    %538 = vmatpush2.bf16.msra.mxu0 0
    %539 = vmatprep.subr.bf16.mxu0 0
    %540 = vmatpush2.bf16.msra.mxu0 0
    %541 = vmatprep.subr.bf16.mxu0 0
    %542 = vmatpush2.bf16.msra.mxu0 0
    %543 = vmatprep.subr.bf16.mxu0 0
    %544 = vmatpush2.bf16.msra.mxu0 0
    %545 = vmatprep.subr.bf16.mxu0 0
    %546 = vmatpush2.bf16.msra.mxu0 0
    %547 = vmatprep.subr.bf16.mxu0 0
    %548 = vmatpush2.bf16.msra.mxu0 0
    %549 = vmatprep.mubr.bf16.mxu0 0
    %550 = vmatmul.mubr.bf16.gmra.mxu0 %v73
    %v551 = vpop.f32.mrf.mxu0
    %v552 = vadd.f32 %v343, %v551
    %v553 = vpop.f32.mrf.mxu0
    %v554 = vpop.f32.mrf.mxu0
    %v555 = vpop.f32.mrf.mxu0
    %556 = vdwg.mxu0
    %v557 = vld [vmem:[%s4] sm:$0x7]
    %v559 = vlaneseq
    %v560 = vshrl.u32 %v559, 7
    %v561 = vsub.s32 0, %v560
    %v562 = vrot.slane %v557, %v561
    %v563 = vlaneseq
    %v564 = vshrl.u32 %v563, 7
    %v565 = vsub.s32 1, %v564
    %v566 = vrot.slane %v557, %v565
    %v567 = vlaneseq
    %v568 = vshrl.u32 %v567, 7
    %v569 = vsub.s32 2, %v568
    %v570 = vrot.slane %v557, %v569
    %v574 = vadd.f32 %v511, %v562
    %v575 = vadd.f32 %v513, %v566
    %v576 = vadd.f32 %v552, %v570
    %v577 = vxor.u32 %v574, 2147483648
    %v578 = vmul.f32 %v577, 1.442695
    %v579 = vpow.pop %v578
    %v580 = vadd.f32 %v579, 1.0
    %v581 = vrcp.pop %v580
    %v582 = vmul.f32 1.0, %v581
    %v583 = vxor.u32 %v575, 2147483648
    %v584 = vmul.f32 %v583, 1.442695
    %v585 = vpow.pop %v584
    %v586 = vadd.f32 %v585, 1.0
    %v587 = vrcp.pop %v586
    %v588 = vmul.f32 1.0, %v587
    %v589 = vadd.f32 %v576, %v582
    %v590 = vtanh.pop %v589
    %v591 = vunpack.c.l.bf16 %v106
    %v592 = vsub.f32 %v591, %v590
    %v593 = vmul.f32 %v588, %v592
    %v594 = vadd.f32 %v590, %v593
    %595 = vst [vmem:[#allocation10] sm:$0xff] %v594
    // Predicated region
    $region38: #{tpu_custom_call.1} parent=1 // pred_check
      _
    $region39: #{tpu_custom_call.1} parent=1 // pred_check_branch
      %597 = sbr.rel (0) target = $region41
    $region40: #{tpu_custom_call.1} parent=1 // pred_region
      %s599 = ssub.s32 128, 128
      %600 = vsyncadd [#allocation4], %s599
      %s602 = sshll.u32 [#allocation10], 4
      %s603 = int_to_ptr.vmem [resolvable:$true] %s602
      %605 = dma.vmem_to_hbm [thread:$0]  %s603, 128, %s5, [#allocation4]
    $region41: #{tpu_custom_call.1} parent=1 // pred_fallthru
      _
    // Predicated region
    $region42: #{tpu_custom_call.1} parent=1 // pred_check
      _
    $region43: #{tpu_custom_call.1} parent=1 // pred_check_branch
      %607 = sbr.rel (0) target = $region45
    $region44: #{tpu_custom_call.1} parent=1 // pred_region
      %608 = dma.done [#allocation4], 128
    $region45: #{tpu_custom_call.1} parent=1 // pred_fallthru
      _
    %609 = vsyncpa [#allocation3], 1
    %610 = vsyncpa [#allocation6], 1
    %611 = vsyncpa [#allocation9], 1
    %612 = vsyncpa [#allocation4], 1

</llo_original>
